<compile_context>
chip_gen: v7x
topology: tpu7x:2x2x1
jax: 0.10.0
libtpu: 0.0.40
codegen_flags: <defaults>
</compile_context>

<pallas_src>
import functools
import math
from dataclasses import dataclass
from typing import Optional

import jax
import jax.numpy as jnp
from jax.experimental import pallas as pl
from jax.experimental.pallas import tpu as pltpu


# -----------------------------------------------------------------------------
# Config (mirrors the PyTorch ModelArgs)
# -----------------------------------------------------------------------------
@dataclass
class ModelArgs:
    dim: int = 4096
    n_layers: int = 32
    n_heads: int = 32
    n_kv_heads: Optional[int] = None
    vocab_size: int = -1
    multiple_of: int = 256
    ffn_dim_multiplier: Optional[int] = None
    norm_eps: float = 1e-05
    max_batch_size: int = 32
    max_seq_len: int = 2048
    device: str = None


def compute_hidden_dim(args: ModelArgs) -> int:
    hidden_dim = 4 * args.dim
    hidden_dim = int(2 * hidden_dim / 3)
    if args.ffn_dim_multiplier is not None:
        hidden_dim = int(args.ffn_dim_multiplier * hidden_dim)
    return args.multiple_of * ((hidden_dim + args.multiple_of - 1) // args.multiple_of)


def _round_up(a: int, b: int) -> int:
    return ((a + b - 1) // b) * b


# Fits v7x's 64 MiB physical VMEM; well above the default scoped limits on
# v5e (16 MiB) / v6e (32 MiB) so large tiles stay double-buffered.
_VMEM_LIMIT = 64 * 1024 * 1024


# -----------------------------------------------------------------------------
# RMSNorm kernel (keeps the reference's sqrt quirk)
# -----------------------------------------------------------------------------
def _rmsnorm_kernel(x_ref, w_ref, o_ref, *, eps):
    xf = x_ref[...].astype(jnp.float32)
    ms = jnp.mean(xf * xf, axis=-1, keepdims=True)
    # NOTE: the reference module multiplies by sqrt(mean(x^2)+eps) (NOT rsqrt).
    y = xf * jnp.sqrt(ms + eps)
    o_ref[...] = (w_ref[...].astype(jnp.float32) * y).astype(o_ref.dtype)


def rmsnorm(x, weight, eps, *, tm=256):
    B, S, D = x.shape
    M = B * S
    x2d = x.reshape(M, D)
    tm_e = min(tm, _round_up(M, 8))
    Mp = _round_up(M, tm_e)
    if Mp != M:
        x2d = jnp.pad(x2d, ((0, Mp - M), (0, 0)))
    w2d = weight.reshape(1, D)

    out = pl.pallas_call(
        functools.partial(_rmsnorm_kernel, eps=eps),
        out_shape=jax.ShapeDtypeStruct((Mp, D), x.dtype),
        grid_spec=pltpu.PrefetchScalarGridSpec(
            num_scalar_prefetch=0,
            grid=(Mp // tm_e,),
            in_specs=[
                pl.BlockSpec((tm_e, D), lambda i: (i, 0)),
                pl.BlockSpec((1, D), lambda i: (0, 0)),
            ],
            out_specs=pl.BlockSpec((tm_e, D), lambda i: (i, 0)),
        ),
        compiler_params=pltpu.CompilerParams(
            dimension_semantics=("parallel",),
            vmem_limit_bytes=_VMEM_LIMIT,
        ),
    )(x2d, w2d)
    return out[:M].reshape(B, S, D)


# -----------------------------------------------------------------------------
# Linear kernel: y = x @ W^T  with W in nn.Linear (out, in) layout
# -----------------------------------------------------------------------------
def _linear_kernel(x_ref, w_ref, o_ref):
    o_ref[...] = jax.lax.dot_general(
        x_ref[...], w_ref[...],
        dimension_numbers=(((1,), (1,)), ((), ())),
        preferred_element_type=jnp.float32,
    ).astype(o_ref.dtype)


def linear(x2d, w, *, tm=256, tn=256):
    M, Din = x2d.shape
    Dout = w.shape[0]
    tm_e = min(tm, _round_up(M, 8))
    tn_e = min(tn, _round_up(Dout, 128))
    Mp = _round_up(M, tm_e)
    Np = _round_up(Dout, tn_e)
    xp = x2d if Mp == M else jnp.pad(x2d, ((0, Mp - M), (0, 0)))
    wp = w if Np == Dout else jnp.pad(w, ((0, Np - Dout), (0, 0)))

    out = pl.pallas_call(
        _linear_kernel,
        out_shape=jax.ShapeDtypeStruct((Mp, Np), x2d.dtype),
        grid_spec=pltpu.PrefetchScalarGridSpec(
            num_scalar_prefetch=0,
            grid=(Mp // tm_e, Np // tn_e),
            in_specs=[
                pl.BlockSpec((tm_e, Din), lambda i, j: (i, 0)),
                pl.BlockSpec((tn_e, Din), lambda i, j: (j, 0)),
            ],
            out_specs=pl.BlockSpec((tm_e, tn_e), lambda i, j: (i, j)),
        ),
        compiler_params=pltpu.CompilerParams(
            dimension_semantics=("parallel", "parallel"),
            vmem_limit_bytes=_VMEM_LIMIT,
        ),
    )(xp, wp)
    return out[:M, :Dout]


# -----------------------------------------------------------------------------
# Attention kernel: one (batch, head) per grid step, full softmax (no mask,
# matching the reference forward)
# -----------------------------------------------------------------------------
def _attention_kernel(q_ref, k_ref, v_ref, o_ref, *, scale):
    q = q_ref[0].astype(jnp.float32)                       # (Sq, hd)
    k = k_ref[0].astype(jnp.float32)                       # (Skv, hd)
    s = jax.lax.dot_general(
        q, k, dimension_numbers=(((1,), (1,)), ((), ())),
        preferred_element_type=jnp.float32) * scale        # (Sq, Skv)
    m = jnp.max(s, axis=-1, keepdims=True)
    p = jnp.exp(s - m)
    p = p / jnp.sum(p, axis=-1, keepdims=True)
    o = jnp.dot(p.astype(v_ref.dtype), v_ref[0],
                preferred_element_type=jnp.float32)
    o_ref[0] = o.astype(o_ref.dtype)


def attention(q, k, v, *, scale):
    # q: (B*H, Sq, hd); k, v: (B*H, Skv, hd)
    BH, Sq, hd = q.shape
    Skv = k.shape[1]
    # TODO(synk): for long contexts replace with a K-tiled flash-attention
    # kernel (online softmax) instead of holding the full Skv per head in VMEM.
    return pl.pallas_call(
        functools.partial(_attention_kernel, scale=scale),
        out_shape=jax.ShapeDtypeStruct((BH, Sq, hd), q.dtype),
        grid_spec=pltpu.PrefetchScalarGridSpec(
            num_scalar_prefetch=0,
            grid=(BH,),
            in_specs=[
                pl.BlockSpec((1, Sq, hd), lambda i: (i, 0, 0)),
                pl.BlockSpec((1, Skv, hd), lambda i: (i, 0, 0)),
                pl.BlockSpec((1, Skv, hd), lambda i: (i, 0, 0)),
            ],
            out_specs=pl.BlockSpec((1, Sq, hd), lambda i: (i, 0, 0)),
        ),
        compiler_params=pltpu.CompilerParams(
            dimension_semantics=("parallel",),
            vmem_limit_bytes=_VMEM_LIMIT,
        ),
    )(q, k, v)


# -----------------------------------------------------------------------------
# FeedForward kernel: out = (silu(x @ W1^T) * (x @ W1^T)) @ W2^T, H streamed
# -----------------------------------------------------------------------------
def _ffn_kernel(x_ref, w1_ref, w2_ref, o_ref, acc_ref):
    j = pl.program_id(1)

    @pl.when(j == 0)
    def _():
        acc_ref[...] = jnp.zeros_like(acc_ref)

    # h = x @ W1_chunk^T (contract the model dim), f32 MXU accumulation
    h = jax.lax.dot_general(
        x_ref[...], w1_ref[...],
        dimension_numbers=(((1,), (1,)), ((), ())),
        preferred_element_type=jnp.float32,
    )
    # silu(w1 x) * (w1 x): the reference uses w1 for BOTH gate and value
    g = (h * jax.nn.sigmoid(h)) * h
    # acc += g @ W2[:, chunk]^T (contract the hidden chunk)
    acc_ref[...] += jax.lax.dot_general(
        g.astype(w2_ref.dtype), w2_ref[...],
        dimension_numbers=(((1,), (1,)), ((), ())),
        preferred_element_type=jnp.float32,
    )

    @pl.when(j == pl.num_programs(1) - 1)
    def _():
        o_ref[...] = acc_ref[...].astype(o_ref.dtype)


def feed_forward(x, w1, w2, w3, *, tm=256, th=256):
    # x: (B, S, D); w1: (H, D); w2: (D, H); w3: (H, D) exists in the module but
    # is unused by the reference forward.
    del w3
    B, S, D = x.shape
    H = w1.shape[0]
    M = B * S
    x2d = x.reshape(M, D)

    tm_e = min(tm, _round_up(M, 8))
    th_e = min(th, _round_up(H, 128))
    Mp = _round_up(M, tm_e)
    Hp = _round_up(H, th_e)
    if Mp != M:
        x2d = jnp.pad(x2d, ((0, Mp - M), (0, 0)))
    # Zero-padding the hidden dim is exact: padded W1 rows give h = 0, so
    # silu(0)*0 = 0 contributes nothing (and the matching W2 columns are 0 too).
    w1p = w1 if Hp == H else jnp.pad(w1, ((0, Hp - H), (0, 0)))
    w2p = w2 if Hp == H else jnp.pad(w2, ((0, 0), (0, Hp - H)))

    out = pl.pallas_call(
        _ffn_kernel,
        out_shape=jax.ShapeDtypeStruct((Mp, D), x.dtype),
        grid_spec=pltpu.PrefetchScalarGridSpec(
            num_scalar_prefetch=0,
            grid=(Mp // tm_e, Hp // th_e),          # hidden (reduction) axis last
            in_specs=[
                pl.BlockSpec((tm_e, D), lambda i, j: (i, 0)),   # x row tile
                pl.BlockSpec((th_e, D), lambda i, j: (j, 0)),   # W1 hidden chunk
                pl.BlockSpec((D, th_e), lambda i, j: (0, j)),   # W2 hidden chunk
            ],
            out_specs=pl.BlockSpec((tm_e, D), lambda i, j: (i, 0)),
            scratch_shapes=[pltpu.VMEM((tm_e, D), jnp.float32)],
        ),
        compiler_params=pltpu.CompilerParams(
            dimension_semantics=("parallel", "arbitrary"),
            vmem_limit_bytes=_VMEM_LIMIT,
        ),
    )(x2d, w1p, w2p)
    return out[:M].reshape(B, S, D)


# -----------------------------------------------------------------------------
# JAX glue (RoPE, KV cache, head bookkeeping) + full EncoderBlock forward
# -----------------------------------------------------------------------------
def apply_rotary_embeddings(x, cos, sin):
    # x: (B, S, H, hd); cos/sin: (S, hd//2). Interleaved even/odd complex
    # rotation, matching torch.view_as_complex on reshape(..., -1, 2).
    B, S, H, hd = x.shape
    xr = x.astype(jnp.float32).reshape(B, S, H, hd // 2, 2)
    xe, xo = xr[..., 0], xr[..., 1]
    c = cos[None, :, None, :]
    s = sin[None, :, None, :]
    oe = xe * c - xo * s
    oo = xe * s + xo * c
    return jnp.stack([oe, oo], axis=-1).reshape(B, S, H, hd).astype(x.dtype)


def repeat_kv(x, n_rep):
    if n_rep == 1:
        return x
    b, s, nkv, hd = x.shape
    return jnp.broadcast_to(
        x[:, :, :, None, :], (b, s, nkv, n_rep, hd)
    ).reshape(b, s, nkv * n_rep, hd)


def self_attention(x, p, start_pos, cos, sin, cache_k, cache_v, args):
    B, S, D = x.shape
    n_heads = args.n_heads
    n_kv = args.n_kv_heads if args.n_kv_heads is not None else args.n_heads
    hd = D // n_heads
    n_rep = n_heads // n_kv

    x2d = x.reshape(B * S, D)
    xq = linear(x2d, p["wq"]).reshape(B, S, n_heads, hd)
    xk = linear(x2d, p["wk"]).reshape(B, S, n_kv, hd)
    xv = linear(x2d, p["wv"]).reshape(B, S, n_kv, hd)

    xq = apply_rotary_embeddings(xq, cos, sin)
    xk = apply_rotary_embeddings(xk, cos, sin)

    # TODO(synk): RoPE + KV-cache write are plain-JAX glue; for decode they
    # could be fused into a paged-attention kernel using input_output_aliases.
    cache_k = jax.lax.dynamic_update_slice(
        cache_k, xk.astype(cache_k.dtype), (0, start_pos, 0, 0))
    cache_v = jax.lax.dynamic_update_slice(
        cache_v, xv.astype(cache_v.dtype), (0, start_pos, 0, 0))

    Skv = start_pos + S
    keys = repeat_kv(cache_k[:B, :Skv], n_rep).astype(x.dtype)
    values = repeat_kv(cache_v[:B, :Skv], n_rep).astype(x.dtype)

    q = jnp.transpose(xq, (0, 2, 1, 3)).reshape(B * n_heads, S, hd)
    k = jnp.transpose(keys, (0, 2, 1, 3)).reshape(B * n_heads, Skv, hd)
    v = jnp.transpose(values, (0, 2, 1, 3)).reshape(B * n_heads, Skv, hd)

    o = attention(q, k, v, scale=1.0 / math.sqrt(hd))
    o = o.reshape(B, n_heads, S, hd).transpose(0, 2, 1, 3).reshape(B * S, n_heads * hd)
    out = linear(o, p["wo"]).reshape(B, S, D)
    return out, cache_k, cache_v


def encoder_block(x, p, start_pos, cos, sin, cache_k, cache_v, args):
    # NOTE: the PyTorch spec passes eps=args.eps (which ModelArgs doesn't have);
    # norm_eps is the intended field and is used here.
    attn_in = rmsnorm(x, p["attn_norm_w"], args.norm_eps)
    attn_out, cache_k, cache_v = self_attention(
        attn_in, p, start_pos, cos, sin, cache_k, cache_v, args)
    h = x + attn_out
    ffn_in = rmsnorm(h, p["ffn_norm_w"], args.norm_eps)
    out = h + feed_forward(ffn_in, p["w1"], p["w2"], p["w3"])
    return out, cache_k, cache_v


# -----------------------------------------------------------------------------
# Pure-JAX reference matching the PyTorch forward exactly
# -----------------------------------------------------------------------------
def reference_encoder_block(x, p, start_pos, cos, sin, cache_k, cache_v, args):
    D = args.dim
    n_heads = args.n_heads
    n_kv = args.n_kv_heads if args.n_kv_heads is not None else args.n_heads
    hd = D // n_heads
    n_rep = n_heads // n_kv
    eps = args.norm_eps

    def rms(v, w):
        vf = v.astype(jnp.float32)
        ms = jnp.mean(vf * vf, axis=-1, keepdims=True)
        return w * (vf * jnp.sqrt(ms + eps)).astype(v.dtype)

    B, S, _ = x.shape
    hin = rms(x, p["attn_norm_w"])
    xq = (hin @ p["wq"].T).reshape(B, S, n_heads, hd)
    xk = (hin @ p["wk"].T).reshape(B, S, n_kv, hd)
    xv = (hin @ p["wv"].T).reshape(B, S, n_kv, hd)
    xq = apply_rotary_embeddings(xq, cos, sin)
    xk = apply_rotary_embeddings(xk, cos, sin)
    cache_k = jax.lax.dynamic_update_slice(cache_k, xk, (0, start_pos, 0, 0))
    cache_v = jax.lax.dynamic_update_slice(cache_v, xv, (0, start_pos, 0, 0))
    keys = repeat_kv(cache_k[:B, :start_pos + S], n_rep)
    values = repeat_kv(cache_v[:B, :start_pos + S], n_rep)
    q = xq.transpose(0, 2, 1, 3)
    k = keys.transpose(0, 2, 1, 3)
    v = values.transpose(0, 2, 1, 3)
    sc = jnp.einsum("bhqd,bhkd->bhqk", q, k) / math.sqrt(hd)
    pr = jax.nn.softmax(sc.astype(jnp.float32), axis=-1).astype(q.dtype)
    o = jnp.einsum("bhqk,bhkd->bhqd", pr, v)
    o = o.transpose(0, 2, 1, 3).reshape(B, S, n_heads * hd)
    h = x + o @ p["wo"].T
    fin = rms(h, p["ffn_norm_w"])
    w1h = fin @ p["w1"].T
    ff = ((w1h * jax.nn.sigmoid(w1h)) * w1h) @ p["w2"].T
    return h + ff


# -----------------------------------------------------------------------------
# Demo
# -----------------------------------------------------------------------------
if __name__ == "__main__":
    args = ModelArgs(dim=128, n_heads=4, multiple_of=128,
                     max_batch_size=4, max_seq_len=16)
    B, S, start_pos = 2, 8, 0
    D = args.dim
    n_heads = args.n_heads
    n_kv = args.n_kv_heads if args.n_kv_heads is not None else args.n_heads
    hd = D // n_heads
    H = compute_hidden_dim(args)   # 384

    key = jax.random.PRNGKey(0)
    ks = jax.random.split(key, 10)

    def lin_w(k, fan_out, fan_in):
        return jax.random.normal(k, (fan_out, fan_in), jnp.float32) * (1.0 / fan_in) ** 0.5

    x = jax.random.normal(ks[0], (B, S, D), jnp.float32)
    params = {
        "wq": lin_w(ks[1], n_heads * hd, D),
        "wk": lin_w(ks[2], n_kv * hd, D),
        "wv": lin_w(ks[3], n_kv * hd, D),
        "wo": lin_w(ks[4], D, n_heads * hd),
        "w1": lin_w(ks[5], H, D),
        "w2": lin_w(ks[6], D, H),
        "w3": lin_w(ks[7], H, D),   # present in the module, unused by forward
        "attn_norm_w": 1.0 + 0.02 * jax.random.normal(ks[8], (D,), jnp.float32),
        "ffn_norm_w": 1.0 + 0.02 * jax.random.normal(ks[9], (D,), jnp.float32),
    }
    cache_k = jnp.zeros((args.max_batch_size, args.max_seq_len, n_kv, hd), jnp.float32)
    cache_v = jnp.zeros_like(cache_k)

    # freqs_complex equivalent (cos/sin of rotary angles for positions
    # [start_pos, start_pos + S))
    inv = 1.0 / (10000.0 ** (jnp.arange(0, hd, 2, dtype=jnp.float32) / hd))
    t = jnp.arange(start_pos, start_pos + S, dtype=jnp.float32)
    freqs = jnp.outer(t, inv)
    cos, sin = jnp.cos(freqs), jnp.sin(freqs)

    out, new_ck, new_cv = encoder_block(
        x, params, start_pos, cos, sin, cache_k, cache_v, args)
    jax.block_until_ready(out)

    ref = reference_encoder_block(
        x, params, start_pos, cos, sin, cache_k, cache_v, args)
    assert out.shape == (B, S, D)
    err = jnp.max(jnp.abs(out - ref))
    assert jnp.allclose(out, ref, atol=2e-3, rtol=2e-3), f"mismatch vs reference: {err}"

    print("KERNEL_OK")
</pallas_src>

<mosaic_0001>
module attributes {stable_mosaic.version = 11 : i64} {
  func.func @_rmsnorm_kernel(%arg0: i32, %arg1: memref<16x128xf32, #tpu.memory_space<vmem>>, %arg2: memref<1x128xf32, #tpu.memory_space<vmem>>, %arg3: memref<16x128xf32, #tpu.memory_space<vmem>>) attributes {dimension_semantics = [#tpu.dimension_semantics<parallel>], iteration_bounds = array<i64: 1>, scalar_prefetch = 0 : i64, scratch_operands = 0 : i64, tpu.core_type = #tpu.core_type<tc>, window_params = [{transform_indices = @transform_0, window_bounds = array<i64: 16, 128>}, {pipeline_mode = #tpu.pipeline_mode<synchronous>, transform_indices = @transform_1, window_bounds = array<i64: 1, 128>}, {transform_indices = @transform_2, window_bounds = array<i64: 16, 128>}]} {
    %c0 = arith.constant 0 : index
    %c0_0 = arith.constant 0 : index
    %0 = vector.load %arg1[%c0, %c0_0] : memref<16x128xf32, #tpu.memory_space<vmem>>, vector<16x128xf32>
    %1 = arith.mulf %0, %0 : vector<16x128xf32>
    %cst = arith.constant dense<0.000000e+00> : vector<16xf32>
    %2 = vector.multi_reduction <add>, %1, %cst [1] : vector<16x128xf32> to vector<16xf32>
    %3 = vector.shape_cast %2 : vector<16xf32> to vector<16x1xf32>
    %cst_1 = arith.constant 1.280000e+02 : f32
    %4 = vector.broadcast %cst_1 : f32 to vector<16x1xf32>
    %5 = arith.divf %3, %4 : vector<16x1xf32>
    %cst_2 = arith.constant 9.99999974E-6 : f32
    %6 = vector.broadcast %cst_2 : f32 to vector<16x1xf32>
    %7 = arith.addf %5, %6 : vector<16x1xf32>
    %8 = math.sqrt %7 : vector<16x1xf32>
    %9 = vector.broadcast %8 : vector<16x1xf32> to vector<16x128xf32>
    %10 = arith.mulf %0, %9 : vector<16x128xf32>
    %c0_3 = arith.constant 0 : index
    %c0_4 = arith.constant 0 : index
    %11 = vector.load %arg2[%c0_3, %c0_4] : memref<1x128xf32, #tpu.memory_space<vmem>>, vector<1x128xf32>
    %12 = vector.broadcast %11 : vector<1x128xf32> to vector<16x128xf32>
    %13 = arith.mulf %12, %10 : vector<16x128xf32>
    %c0_5 = arith.constant 0 : index
    %c0_6 = arith.constant 0 : index
    %14 = vector.load %arg3[%c0_5, %c0_6] : memref<16x128xf32, #tpu.memory_space<vmem>>, vector<16x128xf32>
    tpu.vector_store %arg3[%c0_5, %c0_6], %13 {strides = array<i32>} : memref<16x128xf32, #tpu.memory_space<vmem>>, vector<16x128xf32>,
    return
  }
  func.func @transform_0(%arg0: i32) -> (i32, i32) {
    %c0_i32 = arith.constant 0 : i32
    %c0_i32_0 = arith.constant 0 : i32
    return %arg0, %c0_i32 : i32, i32
  }
  func.func @transform_1(%arg0: i32) -> (i32, i32) {
    %c0_i32 = arith.constant 0 : i32
    %c0_i32_0 = arith.constant 0 : i32
    %c0_i32_1 = arith.constant 0 : i32
    return %c0_i32, %c0_i32_0 : i32, i32
  }
  func.func @transform_2(%arg0: i32) -> (i32, i32) {
    %c0_i32 = arith.constant 0 : i32
    %c0_i32_0 = arith.constant 0 : i32
    return %arg0, %c0_i32 : i32, i32
  }
}

</mosaic_0001>

<llo_original>
// kernel: tpu_custom_call.1
$region0: #{tpu_custom_call.1}
  #allocation0 [shape = 'u32[]', space=smem, size = 0x4, offset = 0x4, fixed_abs, tag = 'smem constant byte address 0x4 - core index']
  #allocation1 [shape = 'u32[144,128]{1,0:T(1,128)}', space=vmem, size = 0x12000, scoped, tag = 'internal scratch']
  %s0 = inlined_call_operand.hbm [shape: f32[16,128], index: 0, kind: input, shape index: {}]
  %s1 = inlined_call_operand.hbm [shape: f32[1,128], index: 1, kind: input, shape index: {}]
  %s2 = inlined_call_operand.hbm [shape: f32[16,128], index: 2, kind: output, shape index: {}]
  %s3 = sld [smem:[#allocation0]]
  $region26: #{tpu_custom_call.1} parent=0
    _
  %s5 = ssub.s32 1, %s3
  %s6 = scalar_select 0, %s5, %s3
  $region1: #{tpu_custom_call.1} parent=0
    #allocation2 [shape = 'u8[8192]{0}', space=vmem, size = 0x2000, scoped, tag = 'input window, operand 0, single buffered']
    #allocation3 [shape = 's32[1]{0}', space=sflag, size = 0x4, scoped, tag = 'scoped memory for tpu_custom_call.1']
    #allocation4 [shape = 's32[1]{0}', space=sflag, size = 0x4, scoped, tag = 'scoped memory for tpu_custom_call.1']
    #allocation5 [shape = 'u8[512]{0}', space=vmem, size = 0x400, scoped, tag = 'input window, operand 1, single buffered']
    #allocation6 [shape = 's32[1]{0}', space=sflag, size = 0x4, scoped, tag = 'scoped memory for tpu_custom_call.1']
    #allocation7 [shape = 'u8[8192]{0}', space=vmem, size = 0x2000, scoped, tag = 'output window, operand 0, single buffered']
    %7 = vsyncpa [#allocation3], 0
    %8 = vsyncpa [#allocation6], 0
    %9 = vsyncpa [#allocation4], 0
    // Predicated region
    $region2: #{tpu_custom_call.1} parent=1 // pred_check
      _
    $region3: #{tpu_custom_call.1} parent=1 // pred_check_branch
      %11 = sbr.rel (0) target = $region5
    $region4: #{tpu_custom_call.1} parent=1 // pred_region
      %s13 = ssub.s32 256, 256
      %14 = vsyncadd [#allocation3], %s13
      %s15 = sshll.u32 [#allocation2], 4
      %s16 = int_to_ptr.vmem [resolvable:$true] %s15
      %21 = dma.hbm_to_vmem [thread:$0]  %s0, 256, %s16, [#allocation3], 128, 128, 8
    $region5: #{tpu_custom_call.1} parent=1 // pred_fallthru
      _
    // Predicated region
    $region6: #{tpu_custom_call.1} parent=1 // pred_check
      _
    $region7: #{tpu_custom_call.1} parent=1 // pred_check_branch
      %23 = sbr.rel (0) target = $region9
    $region8: #{tpu_custom_call.1} parent=1 // pred_region
      %s25 = ssub.s32 16, 16
      %26 = vsyncadd [#allocation6], %s25
      %s28 = sshll.u32 [#allocation5], 4
      %s29 = int_to_ptr.vmem [resolvable:$true] %s28
      %31 = dma.hbm_to_vmem [thread:$0]  %s1, 16, %s29, [#allocation6]
    $region9: #{tpu_custom_call.1} parent=1 // pred_fallthru
      _
    // Predicated region
    $region10: #{tpu_custom_call.1} parent=1 // pred_check
      _
    $region11: #{tpu_custom_call.1} parent=1 // pred_check_branch
      %33 = sbr.rel (0) target = $region13
    $region12: #{tpu_custom_call.1} parent=1 // pred_region
      %34 = dma.done [#allocation3], 256
    $region13: #{tpu_custom_call.1} parent=1 // pred_fallthru
      _
    // Predicated region
    $region14: #{tpu_custom_call.1} parent=1 // pred_check
      _
    $region15: #{tpu_custom_call.1} parent=1 // pred_check_branch
      %36 = sbr.rel (0) target = $region17
    $region16: #{tpu_custom_call.1} parent=1 // pred_region
      %37 = dma.done [#allocation6], 16
    $region17: #{tpu_custom_call.1} parent=1 // pred_fallthru
      _
    %v38 = vld [vmem:[#allocation2] sm:$0xff]
    %v39 = vld [vmem:[#allocation2 + $0x8] sm:$0xff]
    %v40 = vmul.f32 %v38, %v38
    %v41 = vmul.f32 %v39, %v39
    %42 = vadd.xlane.f32.xlu0 %v40
    %v43 = vpop.xlane.xlu0 %42
    %44 = vadd.xlane.f32.xlu0 %v41
    %v45 = vpop.xlane.xlu0 %44
    %v46 = vrcp.pop 128.0
    %v47 = vmul.f32 %v43, %v46
    %v48 = vmul.f32 %v45, %v46
    %v49 = vadd.f32 %v47, 1e-05
    %v50 = vadd.f32 %v48, 1e-05
    %v51 = vrsqrt.pop %v49
    %v52 = vmul.f32 %v49, %v51
    %vm53 = vcmp.eq.f32.partialorder %v49, inf
    %v54 = vsel %vm53, %v49, %v52
    %vm55 = vcmp.eq.f32.partialorder %v49, 0.0
    %v56 = vand.u32 %v49, 2147483648
    %v57 = vsel %vm55, %v56, %v54
    %v58 = vrsqrt.pop %v50
    %v59 = vmul.f32 %v50, %v58
    %vm60 = vcmp.eq.f32.partialorder %v50, inf
    %v61 = vsel %vm60, %v50, %v59
    %vm62 = vcmp.eq.f32.partialorder %v50, 0.0
    %v63 = vand.u32 %v50, 2147483648
    %v64 = vsel %vm62, %v63, %v61
    %v65 = vmul.f32 %v38, %v57
    %v66 = vmul.f32 %v39, %v64
    %v67 = vld [vmem:[#allocation5] sm:$0x1]
    %v69 = vlaneseq
    %v70 = vshrl.u32 %v69, 7
    %v71 = vsub.s32 0, %v70
    %v72 = vrot.slane %v67, %v71
    %v74 = vmul.f32 %v72, %v65
    %v75 = vmul.f32 %v72, %v66
    %76 = vst [vmem:[#allocation7] sm:$0xff] %v74
    %77 = vst [vmem:[#allocation7 + $0x8] sm:$0xff] %v75
    // Predicated region
    $region18: #{tpu_custom_call.1} parent=1 // pred_check
      _
    $region19: #{tpu_custom_call.1} parent=1 // pred_check_branch
      %79 = sbr.rel (0) target = $region21
    $region20: #{tpu_custom_call.1} parent=1 // pred_region
      %s81 = ssub.s32 256, 256
      %82 = vsyncadd [#allocation4], %s81
      %s83 = sshll.u32 [#allocation7], 4
      %s84 = int_to_ptr.vmem [resolvable:$true] %s83
      %89 = dma.vmem_to_hbm [thread:$0]  %s84, 256, %s2, [#allocation4], 128, 128, 8
    $region21: #{tpu_custom_call.1} parent=1 // pred_fallthru
      _
    // Predicated region
    $region22: #{tpu_custom_call.1} parent=1 // pred_check
      _
    $region23: #{tpu_custom_call.1} parent=1 // pred_check_branch
      %91 = sbr.rel (0) target = $region25
    $region24: #{tpu_custom_call.1} parent=1 // pred_region
      %92 = dma.done [#allocation4], 256
    $region25: #{tpu_custom_call.1} parent=1 // pred_fallthru
      _
    %93 = vsyncpa [#allocation3], 1
    %94 = vsyncpa [#allocation6], 1
    %95 = vsyncpa [#allocation4], 1

</llo_original>
